<compile_context>
chip_gen: v5e
topology: v5e:2x2
jax: 0.10.0
libtpu: 0.0.40
codegen_flags: <defaults>
</compile_context>

<pallas_src>
import functools

import jax
import jax.numpy as jnp
from jax.experimental import pallas as pl
from jax.experimental.pallas import tpu as pltpu


def _rbf_kernel(r_ref, cd_ref, o_ref, *, cutoff, width):
    # r_ref:  (tile_n, 1)   VMEM  f32 distances
    # cd_ref: (2, nb_pad)   VMEM  row 0 = centers c, row 1 = -width*c^2
    # o_ref:  (tile_n, nb_pad) VMEM, lane-dense (nb_pad % 128 == 0)
    r = r_ref[...]                         # (tn, 1)
    cd = cd_ref[...]                       # (2, nb)
    c = cd[0:1, :]                         # (1, nb)
    d = cd[1:2, :]                         # (1, nb) = -width * c^2

    inside = r < cutoff                    # (tn, 1)
    r_safe = jnp.where(inside, r, jnp.zeros_like(r))
    denom = (cutoff - r_safe) * (cutoff + r_safe)            # = cutoff^2 - r_safe^2 > 0
    # narrow (tn,1) cutoff term; approx reciprocal rides the EUP slot (off binding path)
    cut_term = (r_safe * r_safe) * pl.reciprocal(denom, approx=True)

    # narrow per-row pieces of the rank-1 expansion; -inf folds the cutoff mask
    # into the exponent so no wide select is needed (exp(-inf) == 0).
    a = jnp.where(inside, -(cut_term + width * (r * r)), -jnp.inf)   # (tn, 1)
    b = (2.0 * width) * r                                            # (tn, 1)

    # full exponent  -(cut_term + width*(r-c)^2)  ==  a + b*c + d
    expo = (b * c + d) + a                 # 1 wide mul + 2 wide adds
    o_ref[...] = jnp.exp(expo).astype(o_ref.dtype)


@functools.partial(
    jax.jit, static_argnames=("cutoff", "num_basis_functions", "tile_n", "out_dtype")
)
def gaussian_rbf(r, center, *, cutoff, num_basis_functions, tile_n=4096,
                 out_dtype=jnp.bfloat16):
    """r: [N] float32 distances. Returns [N, num_basis_functions] (out_dtype)."""
    n = r.shape[0]
    nb = num_basis_functions
    width = float(num_basis_functions) / float(cutoff)

    # Lane-dense output: pad basis axis up to a multiple of 128 (sliced off afterwards).
    nb_pad = ((nb + 127) // 128) * 128

    # Keep the grid at >= 2 steps for small inputs so the "parallel" edge axis can
    # shard across both v7x TensorCores; otherwise use the requested tile size.
    eff_tile = tile_n
    if n <= tile_n:
        eff_tile = max(256, ((pl.cdiv(n, 2) + 255) // 256) * 256)
    eff_tile = min(eff_tile, tile_n)

    # Arbitrary N: pad edge axis up to a multiple of eff_tile; padded rows get
    # r > cutoff so they evaluate to exactly 0 and are sliced off anyway.
    n_pad = pl.cdiv(n, eff_tile) * eff_tile

    r_p = jnp.pad(r.astype(jnp.float32), (0, n_pad - n),
                  constant_values=float(cutoff) + 1.0)
    c_p = jnp.pad(center.astype(jnp.float32), (0, nb_pad - nb))
    # (2, nb_pad): row 0 = centers, row 1 = -width*c^2 (rank-1 exponent expansion)
    cd = jnp.stack([c_p, -width * c_p * c_p], axis=0)

    r2d = r_p.reshape(n_pad, 1)

    grid = (n_pad // eff_tile,)
    kernel = functools.partial(_rbf_kernel, cutoff=float(cutoff), width=width)

    out_itemsize = jnp.dtype(out_dtype).itemsize
    # Per-step VMEM: r column is lane-padded to 128 lanes (tile_n*512 B) + output tile,
    # both double-buffered. Add headroom; floor at 16 MiB; cap at 64 MiB (<= v7x physical).
    vmem_limit = 2 * (eff_tile * 128 * 4 + eff_tile * nb_pad * out_itemsize) + (4 << 20)
    vmem_limit = max(16 << 20, min(64 << 20, int(vmem_limit)))

    out = pl.pallas_call(
        kernel,
        out_shape=jax.ShapeDtypeStruct((n_pad, nb_pad), out_dtype),
        grid_spec=pltpu.PrefetchScalarGridSpec(
            num_scalar_prefetch=0,
            grid=grid,
            in_specs=[
                pl.BlockSpec((eff_tile, 1), lambda i: (i, 0)),   # r tile (column)
                pl.BlockSpec((2, nb_pad), lambda i: (0, 0)),     # [c; -width*c^2] (const)
            ],
            out_specs=pl.BlockSpec((eff_tile, nb_pad), lambda i: (i, 0)),
        ),
        compiler_params=pltpu.CompilerParams(
            dimension_semantics=("parallel",),
            vmem_limit_bytes=vmem_limit,
        ),
        cost_estimate=pl.CostEstimate(
            flops=4 * n_pad * nb_pad,
            transcendentals=n_pad * nb_pad,
            bytes_accessed=4 * n_pad + 4 * 2 * nb_pad + out_itemsize * n_pad * nb_pad,
        ),
    )(r2d, cd)
    return out[:n, :nb]


def make_params(num_basis_functions, cutoff):
    """Deterministic buffers / parameters mirroring the PyTorch __init__ (float32 on TPU)."""
    center = jnp.linspace(0.0, cutoff, num_basis_functions, dtype=jnp.float32)
    alpha = jnp.array(1.0, dtype=jnp.float32)  # nn.Parameter _alpha: unused in forward
    return center, alpha


def reference(r, center, cutoff, width):
    r = r.reshape(-1, 1)
    c = center.reshape(1, -1)
    inside = r < cutoff
    r_safe = jnp.where(inside, r, 0.0)
    fcut = jnp.where(
        inside, jnp.exp(-(r_safe ** 2) / ((cutoff - r_safe) * (cutoff + r_safe))), 0.0
    )
    return fcut * jnp.exp(-width * (r - c) ** 2)


if __name__ == "__main__":
    num_basis_functions = 128
    cutoff = 5.0
    # Non-multiple of the tile to exercise the cdiv/padding path; tile_n=256 gives a
    # 4-step "parallel" grid at this small test size (default tile_n=4096 for real runs).
    n_edges = 1000

    center, _alpha = make_params(num_basis_functions, cutoff)

    key = jax.random.PRNGKey(0)
    # distances in [0, 6) so some exceed the cutoff and exercise the masked branch
    r = jax.random.uniform(key, (n_edges,), dtype=jnp.float32, minval=0.0, maxval=6.0)
    # one sample just below the cutoff to exercise the denom -> 0 limit (must give 0, no NaN)
    r = r.at[0].set(cutoff * (1.0 - 1e-7))

    ref = reference(r, center, jnp.float32(cutoff),
                    jnp.float32(num_basis_functions / cutoff))

    # f32 output path (tight check against the pure-JAX reference)
    rbf32 = gaussian_rbf(
        r, center, cutoff=cutoff, num_basis_functions=num_basis_functions,
        tile_n=256, out_dtype=jnp.float32,
    )
    rbf32 = jax.block_until_ready(rbf32)
    assert rbf32.shape == (n_edges, num_basis_functions)
    assert bool(jnp.all(jnp.isfinite(rbf32)))
    # approx reciprocal + rank-1 expansion contribute ~1e-4 in the exponent; values in
    # [0, 1], so 1e-3 abs tolerance is ample.
    assert jnp.allclose(rbf32, ref, atol=1e-3, rtol=1e-3), "f32 mismatch vs reference"

    # default path: bf16 output (halved HBM writeback); math stays f32 in-kernel
    rbf16 = gaussian_rbf(
        r, center, cutoff=cutoff, num_basis_functions=num_basis_functions, tile_n=256,
    )
    rbf16 = jax.block_until_ready(rbf16)
    assert rbf16.dtype == jnp.bfloat16
    assert rbf16.shape == (n_edges, num_basis_functions)
    assert bool(jnp.all(jnp.isfinite(rbf16.astype(jnp.float32))))
    assert jnp.allclose(rbf16.astype(jnp.float32), ref, atol=1e-2, rtol=2e-2), \
        "bf16 mismatch vs reference"

    print("KERNEL_OK")
</pallas_src>

<mosaic_0001>
module attributes {stable_mosaic.version = 11 : i64} {
  func.func @_rbf_kernel(%arg0: i32, %arg1: memref<256x1xf32, #tpu.memory_space<vmem>>, %arg2: memref<2x128xf32, #tpu.memory_space<vmem>>, %arg3: memref<256x128xf32, #tpu.memory_space<vmem>>) attributes {dimension_semantics = [#tpu.dimension_semantics<parallel>], iteration_bounds = array<i64: 4>, scalar_prefetch = 0 : i64, scratch_operands = 0 : i64, tpu.core_type = #tpu.core_type<tc>, window_params = [{transform_indices = @transform_0, window_bounds = array<i64: 256, 1>}, {pipeline_mode = #tpu.pipeline_mode<synchronous>, transform_indices = @transform_1, window_bounds = array<i64: 2, 128>}, {transform_indices = @transform_2, window_bounds = array<i64: 256, 128>}]} {
    %c0 = arith.constant 0 : index
    %c0_0 = arith.constant 0 : index
    %0 = vector.load %arg1[%c0, %c0_0] : memref<256x1xf32, #tpu.memory_space<vmem>>, vector<256x1xf32>
    %c0_1 = arith.constant 0 : index
    %c0_2 = arith.constant 0 : index
    %1 = vector.load %arg2[%c0_1, %c0_2] : memref<2x128xf32, #tpu.memory_space<vmem>>, vector<2x128xf32>
    %2 = vector.extract_strided_slice %1 {offsets = [0, 0], sizes = [1, 128], strides = [1, 1]} : vector<2x128xf32> to vector<1x128xf32>
    %3 = vector.extract_strided_slice %1 {offsets = [1, 0], sizes = [1, 128], strides = [1, 1]} : vector<2x128xf32> to vector<1x128xf32>
    %cst = arith.constant 5.000000e+00 : f32
    %4 = vector.broadcast %cst : f32 to vector<256x1xf32>
    %5 = arith.cmpf olt, %0, %4 : vector<256x1xf32>
    %cst_3 = arith.constant 0.000000e+00 : f32
    %6 = vector.broadcast %cst_3 : f32 to vector<256x1xf32>
    %7 = arith.select %5, %0, %6 : vector<256x1xi1>, vector<256x1xf32>
    %cst_4 = arith.constant 5.000000e+00 : f32
    %8 = vector.broadcast %cst_4 : f32 to vector<256x1xf32>
    %9 = arith.subf %8, %7 : vector<256x1xf32>
    %cst_5 = arith.constant 5.000000e+00 : f32
    %10 = vector.broadcast %cst_5 : f32 to vector<256x1xf32>
    %11 = arith.addf %10, %7 : vector<256x1xf32>
    %12 = arith.mulf %9, %11 : vector<256x1xf32>
    %13 = arith.mulf %7, %7 : vector<256x1xf32>
    %14 = tpu.reciprocal %12 {approx = true} : vector<256x1xf32> -> vector<256x1xf32>
    %15 = arith.mulf %13, %14 : vector<256x1xf32>
    %16 = arith.mulf %0, %0 : vector<256x1xf32>
    %cst_6 = arith.constant 2.560000e+01 : f32
    %17 = vector.broadcast %cst_6 : f32 to vector<256x1xf32>
    %18 = arith.mulf %17, %16 : vector<256x1xf32>
    %19 = arith.addf %15, %18 : vector<256x1xf32>
    %cst_7 = arith.constant 0.000000e+00 : f32
    %20 = vector.broadcast %cst_7 : f32 to vector<256x1xf32>
    %21 = arith.subf %20, %19 : vector<256x1xf32>
    %cst_8 = arith.constant 0xFF800000 : f32
    %22 = vector.broadcast %cst_8 : f32 to vector<256x1xf32>
    %23 = arith.select %5, %21, %22 : vector<256x1xi1>, vector<256x1xf32>
    %cst_9 = arith.constant 5.120000e+01 : f32
    %24 = vector.broadcast %cst_9 : f32 to vector<256x1xf32>
    %25 = arith.mulf %24, %0 : vector<256x1xf32>
    %26 = vector.broadcast %25 : vector<256x1xf32> to vector<256x128xf32>
    %27 = vector.broadcast %2 : vector<1x128xf32> to vector<256x128xf32>
    %28 = arith.mulf %26, %27 : vector<256x128xf32>
    %29 = vector.broadcast %3 : vector<1x128xf32> to vector<256x128xf32>
    %30 = arith.addf %28, %29 : vector<256x128xf32>
    %31 = vector.broadcast %23 : vector<256x1xf32> to vector<256x128xf32>
    %32 = arith.addf %30, %31 : vector<256x128xf32>
    %33 = math.exp %32 : vector<256x128xf32>
    %c0_10 = arith.constant 0 : index
    %c0_11 = arith.constant 0 : index
    %34 = vector.load %arg3[%c0_10, %c0_11] : memref<256x128xf32, #tpu.memory_space<vmem>>, vector<256x128xf32>
    tpu.vector_store %arg3[%c0_10, %c0_11], %33 {strides = array<i32>} : memref<256x128xf32, #tpu.memory_space<vmem>>, vector<256x128xf32>,
    return
  }
  func.func @transform_0(%arg0: i32) -> (i32, i32) {
    %c0_i32 = arith.constant 0 : i32
    %c0_i32_0 = arith.constant 0 : i32
    return %arg0, %c0_i32 : i32, i32
  }
  func.func @transform_1(%arg0: i32) -> (i32, i32) {
    %c0_i32 = arith.constant 0 : i32
    %c0_i32_0 = arith.constant 0 : i32
    %c0_i32_1 = arith.constant 0 : i32
    return %c0_i32, %c0_i32_0 : i32, i32
  }
  func.func @transform_2(%arg0: i32) -> (i32, i32) {
    %c0_i32 = arith.constant 0 : i32
    %c0_i32_0 = arith.constant 0 : i32
    return %arg0, %c0_i32 : i32, i32
  }
}

</mosaic_0001>

<llo_original>
// kernel: gaussian_rbf.1
$region0: #{gaussian_rbf.1}
  #allocation0 [shape = 'u32[]', space=smem, size = 0x4, offset = 0x4, fixed_abs, tag = 'smem constant byte address 0x4 - core index']
  #allocation1 [shape = 'u32[72,128]{1,0:T(1,128)}', space=vmem, size = 0x9000, scoped, tag = 'internal scratch']
  %s0 = inlined_call_operand.vmem [shape: f32[1024,1], index: 0, kind: input, shape index: {}]
  %s1 = inlined_call_operand.vmem [shape: f32[2,128], index: 1, kind: input, shape index: {}]
  %s2 = inlined_call_operand.vmem [shape: f32[1024,128], index: 2, kind: output, shape index: {}]
  %s3 = sld [smem:[#allocation0]]
  $region41: #{gaussian_rbf.1} parent=0
    _
  %s5 = ssub.s32 1, %s3
  %s6 = scalar_select 0, %s5, %s3
  loop: start=0, step=1, limit=6
  $region2: #{gaussian_rbf.1} parent=0 // loop_pre_header
    _
  $region3: #{gaussian_rbf.1} parent=0 // loop_header
    %s8 = sphi 0, %s12
    %p9 = scmp.ge.s32.totalorder %s8, 6
    %s18 = sphi 0, %s20
    %s21 = sphi 0, %s18
    %s22 = sphi 0, %s21
    %s38 = sphi 0, %s22
    %s42 = sphi 0, %s42
    %s44 = sphi 0, %s42
    %s45 = sphi 0, %s44
    %s59 = sphi 0, %s45
    %s65 = sphi 0, %s67
    %s68 = sphi 0, %s65
    %s69 = sphi 0, %s68
    %s85 = sphi 0, %s69
  $region4: #{gaussian_rbf.1} parent=0 // loop_header_branch
    %11 = sbr.rel (%p9) target = $region8
  $region5: #{gaussian_rbf.1} parent=0 // loop_body
    %s13 = ssub.s32 %s8, 1
    %s14 = ssub.s32 %s8, 2
    %s15 = sadd.s32 %s8, 1
    %s16 = ssub.s32 %s8, %s15
    %p17 = scmp.eq.s32.totalorder %s16, 0
    %s19 = sadd.s32 %s18, 1
    %s20 = scalar_select %p17, %s18, %s19
    %p23 = pneg %p17
    %p24 = scmp.eq.s32.totalorder %s8, 3
    %p25 = por %p23, %p24
    %p26 = scmp.ne.s32.totalorder %s18, %s21
    %p27 = scmp.eq.s32.totalorder %s8, 0
    %p28 = por %p26, %p27
    %p29 = scmp.ne.s32.totalorder %s18, %s21
    %p30 = scmp.eq.s32.totalorder %s13, 3
    %p31 = por %p29, %p30
    %p32 = scmp.ne.s32.totalorder %s21, %s22
    %p33 = scmp.eq.s32.totalorder %s13, 0
    %p34 = por %p32, %p33
    %p35 = scmp.ne.s32.totalorder %s21, %s22
    %p36 = scmp.eq.s32.totalorder %s14, 3
    %p37 = por %p35, %p36
    %p39 = scmp.ne.s32.totalorder %s22, %s38
    %p40 = scmp.eq.s32.totalorder %s14, 0
    %p41 = por %p39, %p40
    %s43 = sadd.s32 %s42, 1
    %p46 = scmp.eq.s32.totalorder %s8, 3
    %p47 = scmp.ne.s32.totalorder %s42, %s44
    %p48 = scmp.eq.s32.totalorder %s8, 0
    %p49 = por %p47, %p48
    %p50 = scmp.ne.s32.totalorder %s42, %s44
    %p51 = scmp.eq.s32.totalorder %s13, 3
    %p52 = por %p50, %p51
    %p53 = scmp.ne.s32.totalorder %s44, %s45
    %p54 = scmp.eq.s32.totalorder %s13, 0
    %p55 = por %p53, %p54
    %p56 = scmp.ne.s32.totalorder %s44, %s45
    %p57 = scmp.eq.s32.totalorder %s14, 3
    %p58 = por %p56, %p57
    %p60 = scmp.ne.s32.totalorder %s45, %s59
    %p61 = scmp.eq.s32.totalorder %s14, 0
    %p62 = por %p60, %p61
    %s63 = ssub.s32 %s8, %s15
    %p64 = scmp.eq.s32.totalorder %s63, 0
    %s66 = sadd.s32 %s65, 1
    %s67 = scalar_select %p64, %s65, %s66
    %p70 = pneg %p64
    %p71 = scmp.eq.s32.totalorder %s8, 3
    %p72 = por %p70, %p71
    %p73 = scmp.ne.s32.totalorder %s65, %s68
    %p74 = scmp.eq.s32.totalorder %s8, 0
    %p75 = por %p73, %p74
    %p76 = scmp.ne.s32.totalorder %s65, %s68
    %p77 = scmp.eq.s32.totalorder %s13, 3
    %p78 = por %p76, %p77
    %p79 = scmp.ne.s32.totalorder %s68, %s69
    %p80 = scmp.eq.s32.totalorder %s13, 0
    %p81 = por %p79, %p80
    %p82 = scmp.ne.s32.totalorder %s68, %s69
    %p83 = scmp.eq.s32.totalorder %s14, 3
    %p84 = por %p82, %p83
    %p86 = scmp.ne.s32.totalorder %s69, %s85
    %p87 = scmp.eq.s32.totalorder %s14, 0
    %p88 = por %p86, %p87
    %p89 = scmp.le.s32.totalorder 1, %s8
    %p90 = scmp.lt.s32.totalorder %s8, 5
    %p91 = pnand %p89, %p90
    %p92 = pneg %p91
    // Predicated region
    $region9: #{gaussian_rbf.1} parent=5 // pred_check
      _
    $region10: #{gaussian_rbf.1} parent=5 // pred_check_branch
      %94 = sbr.rel (%p91) target = $region12
    $region11: #{gaussian_rbf.1} parent=5 // pred_region
      %s95 = ssub.s32 %s8, 1
      // Predicated region
      $region13: #{gaussian_rbf.1} parent=11 // pred_check
        %p96 = pneg %p55
      $region14: #{gaussian_rbf.1} parent=11 // pred_check_branch
        %98 = sbr.rel (%p96) target = $region16
      $region15: #{gaussian_rbf.1} parent=11 // pred_region
        _
      $region16: #{gaussian_rbf.1} parent=11 // pred_fallthru
        _
    $region12: #{gaussian_rbf.1} parent=5 // pred_fallthru
      _
    %p99 = scmp.lt.s32.totalorder %s8, 4
    // Predicated region
    $region17: #{gaussian_rbf.1} parent=5 // pred_check
      %p100 = pneg %p99
    $region18: #{gaussian_rbf.1} parent=5 // pred_check_branch
      %102 = sbr.rel (%p100) target = $region20
    $region19: #{gaussian_rbf.1} parent=5 // pred_region
      // Predicated region
      $region21: #{gaussian_rbf.1} parent=19 // pred_check
        %p103 = pneg %p28
      $region22: #{gaussian_rbf.1} parent=19 // pred_check_branch
        %105 = sbr.rel (%p103) target = $region24
      $region23: #{gaussian_rbf.1} parent=19 // pred_region
        %s106 = smul.u32 32, %s8
        %p107 = scmp.lt.s32.totalorder %s106, 127
        %s108 = scalar_select %p107, %s106, 127
        %s109 = smul.addr %s108, 8
        %s110 = scalar_lea.vmem %s0, %s109
        %s111 = smul.u32 32, %s8
      $region24: #{gaussian_rbf.1} parent=19 // pred_fallthru
        _
    $region20: #{gaussian_rbf.1} parent=5 // pred_fallthru
      _
    %p112 = scmp.le.s32.totalorder 1, %s8
    %p113 = scmp.lt.s32.totalorder %s8, 5
    %p114 = pnand %p112, %p113
    %p115 = pneg %p114
    // Predicated region
    $region25: #{gaussian_rbf.1} parent=5 // pred_check
      _
    $region26: #{gaussian_rbf.1} parent=5 // pred_check_branch
      %117 = sbr.rel (%p114) target = $region28
    $region27: #{gaussian_rbf.1} parent=5 // pred_region
      %s118 = ssub.s32 %s8, 1
      %s119 = smul.u32 32, %s13
      %p120 = scmp.lt.s32.totalorder %s119, 127
      %s121 = scalar_select %p120, %s119, 127
      %s122 = smul.addr %s121, 8
      %s123 = scalar_lea.vmem %s0, %s122
      %p124 = pneg %p34
      %p125 = pneg %p31
      %p126 = pneg %p55
      %p127 = pneg %p52
      %p128 = pneg %p81
      %p129 = pneg %p78
      %s130 = smul.u32 32, %s13
      %p131 = scmp.lt.s32.totalorder %s130, 127
      %s132 = scalar_select %p131, %s130, 127
      %s133 = smul.addr %s132, 8
      %s134 = scalar_lea.vmem %s2, %s133
      %s135 = smul.u32 32, %s13
      %p136 = scmp.lt.s32.totalorder %s135, 127
      %s137 = scalar_select %p136, %s135, 127
      %s138 = smul.addr %s137, 8
      %s139 = scalar_lea.vmem %s0, %s138
      %s140 = smul.u32 32, %s13
      %s141 = smul.u32 32, %s13
      %p142 = scmp.lt.s32.totalorder %s141, 127
      %s143 = scalar_select %p142, %s141, 127
      %s144 = smul.addr %s143, 8
      %s145 = scalar_lea.vmem %s2, %s144
      %s146 = smul.u32 32, %s13
      %v147 = vld [vmem:[%s139] sm:$0xff]
      %v148 = vld [vmem:[%s139 + $0x8] sm:$0xff]
      %v149 = vld [vmem:[%s139 + $0x10] sm:$0xff]
      %v150 = vld [vmem:[%s139 + $0x18] sm:$0xff]
      %v151 = vld [vmem:[%s139 + $0x20] sm:$0xff]
      %v152 = vld [vmem:[%s139 + $0x28] sm:$0xff]
      %v153 = vld [vmem:[%s139 + $0x30] sm:$0xff]
      %v154 = vld [vmem:[%s139 + $0x38] sm:$0xff]
      %v155 = vld [vmem:[%s139 + $0x40] sm:$0xff]
      %v156 = vld [vmem:[%s139 + $0x48] sm:$0xff]
      %v157 = vld [vmem:[%s139 + $0x50] sm:$0xff]
      %v158 = vld [vmem:[%s139 + $0x58] sm:$0xff]
      %v159 = vld [vmem:[%s139 + $0x60] sm:$0xff]
      %v160 = vld [vmem:[%s139 + $0x68] sm:$0xff]
      %v161 = vld [vmem:[%s139 + $0x70] sm:$0xff]
      %v162 = vld [vmem:[%s139 + $0x78] sm:$0xff]
      %v163 = vld [vmem:[%s139 + $0x80] sm:$0xff]
      %v164 = vld [vmem:[%s139 + $0x88] sm:$0xff]
      %v165 = vld [vmem:[%s139 + $0x90] sm:$0xff]
      %v166 = vld [vmem:[%s139 + $0x98] sm:$0xff]
      %v167 = vld [vmem:[%s139 + $0xa0] sm:$0xff]
      %v168 = vld [vmem:[%s139 + $0xa8] sm:$0xff]
      %v169 = vld [vmem:[%s139 + $0xb0] sm:$0xff]
      %v170 = vld [vmem:[%s139 + $0xb8] sm:$0xff]
      %v171 = vld [vmem:[%s139 + $0xc0] sm:$0xff]
      %v172 = vld [vmem:[%s139 + $0xc8] sm:$0xff]
      %v173 = vld [vmem:[%s139 + $0xd0] sm:$0xff]
      %v174 = vld [vmem:[%s139 + $0xd8] sm:$0xff]
      %v175 = vld [vmem:[%s139 + $0xe0] sm:$0xff]
      %v176 = vld [vmem:[%s139 + $0xe8] sm:$0xff]
      %v177 = vld [vmem:[%s139 + $0xf0] sm:$0xff]
      %v178 = vld [vmem:[%s139 + $0xf8] sm:$0xff]
      %v179 = vld [vmem:[%s1] sm:$0x3]
      %vm180 = vcmp.lt.f32.partialorder %v147, 5.0
      %vm181 = vcmp.lt.f32.partialorder %v148, 5.0
      %vm182 = vcmp.lt.f32.partialorder %v149, 5.0
      %vm183 = vcmp.lt.f32.partialorder %v150, 5.0
      %vm184 = vcmp.lt.f32.partialorder %v151, 5.0
      %vm185 = vcmp.lt.f32.partialorder %v152, 5.0
      %vm186 = vcmp.lt.f32.partialorder %v153, 5.0
      %vm187 = vcmp.lt.f32.partialorder %v154, 5.0
      %vm188 = vcmp.lt.f32.partialorder %v155, 5.0
      %vm189 = vcmp.lt.f32.partialorder %v156, 5.0
      %vm190 = vcmp.lt.f32.partialorder %v157, 5.0
      %vm191 = vcmp.lt.f32.partialorder %v158, 5.0
      %vm192 = vcmp.lt.f32.partialorder %v159, 5.0
      %vm193 = vcmp.lt.f32.partialorder %v160, 5.0
      %vm194 = vcmp.lt.f32.partialorder %v161, 5.0
      %vm195 = vcmp.lt.f32.partialorder %v162, 5.0
      %vm196 = vcmp.lt.f32.partialorder %v163, 5.0
      %vm197 = vcmp.lt.f32.partialorder %v164, 5.0
      %vm198 = vcmp.lt.f32.partialorder %v165, 5.0
      %vm199 = vcmp.lt.f32.partialorder %v166, 5.0
      %vm200 = vcmp.lt.f32.partialorder %v167, 5.0
      %vm201 = vcmp.lt.f32.partialorder %v168, 5.0
      %vm202 = vcmp.lt.f32.partialorder %v169, 5.0
      %vm203 = vcmp.lt.f32.partialorder %v170, 5.0
      %vm204 = vcmp.lt.f32.partialorder %v171, 5.0
      %vm205 = vcmp.lt.f32.partialorder %v172, 5.0
      %vm206 = vcmp.lt.f32.partialorder %v173, 5.0
      %vm207 = vcmp.lt.f32.partialorder %v174, 5.0
      %vm208 = vcmp.lt.f32.partialorder %v175, 5.0
      %vm209 = vcmp.lt.f32.partialorder %v176, 5.0
      %vm210 = vcmp.lt.f32.partialorder %v177, 5.0
      %vm211 = vcmp.lt.f32.partialorder %v178, 5.0
      %v212 = vsel %vm180, %v147, 0.0
      %v213 = vsel %vm181, %v148, 0.0
      %v214 = vsel %vm182, %v149, 0.0
      %v215 = vsel %vm183, %v150, 0.0
      %v216 = vsel %vm184, %v151, 0.0
      %v217 = vsel %vm185, %v152, 0.0
      %v218 = vsel %vm186, %v153, 0.0
      %v219 = vsel %vm187, %v154, 0.0
      %v220 = vsel %vm188, %v155, 0.0
      %v221 = vsel %vm189, %v156, 0.0
      %v222 = vsel %vm190, %v157, 0.0
      %v223 = vsel %vm191, %v158, 0.0
      %v224 = vsel %vm192, %v159, 0.0
      %v225 = vsel %vm193, %v160, 0.0
      %v226 = vsel %vm194, %v161, 0.0
      %v227 = vsel %vm195, %v162, 0.0
      %v228 = vsel %vm196, %v163, 0.0
      %v229 = vsel %vm197, %v164, 0.0
      %v230 = vsel %vm198, %v165, 0.0
      %v231 = vsel %vm199, %v166, 0.0
      %v232 = vsel %vm200, %v167, 0.0
      %v233 = vsel %vm201, %v168, 0.0
      %v234 = vsel %vm202, %v169, 0.0
      %v235 = vsel %vm203, %v170, 0.0
      %v236 = vsel %vm204, %v171, 0.0
      %v237 = vsel %vm205, %v172, 0.0
      %v238 = vsel %vm206, %v173, 0.0
      %v239 = vsel %vm207, %v174, 0.0
      %v240 = vsel %vm208, %v175, 0.0
      %v241 = vsel %vm209, %v176, 0.0
      %v242 = vsel %vm210, %v177, 0.0
      %v243 = vsel %vm211, %v178, 0.0
      %v244 = vsub.f32 5.0, %v212
      %v245 = vsub.f32 5.0, %v213
      %v246 = vsub.f32 5.0, %v214
      %v247 = vsub.f32 5.0, %v215
      %v248 = vsub.f32 5.0, %v216
      %v249 = vsub.f32 5.0, %v217
      %v250 = vsub.f32 5.0, %v218
      %v251 = vsub.f32 5.0, %v219
      %v252 = vsub.f32 5.0, %v220
      %v253 = vsub.f32 5.0, %v221
      %v254 = vsub.f32 5.0, %v222
      %v255 = vsub.f32 5.0, %v223
      %v256 = vsub.f32 5.0, %v224
      %v257 = vsub.f32 5.0, %v225
      %v258 = vsub.f32 5.0, %v226
      %v259 = vsub.f32 5.0, %v227
      %v260 = vsub.f32 5.0, %v228
      %v261 = vsub.f32 5.0, %v229
      %v262 = vsub.f32 5.0, %v230
      %v263 = vsub.f32 5.0, %v231
      %v264 = vsub.f32 5.0, %v232
      %v265 = vsub.f32 5.0, %v233
      %v266 = vsub.f32 5.0, %v234
      %v267 = vsub.f32 5.0, %v235
      %v268 = vsub.f32 5.0, %v236
      %v269 = vsub.f32 5.0, %v237
      %v270 = vsub.f32 5.0, %v238
      %v271 = vsub.f32 5.0, %v239
      %v272 = vsub.f32 5.0, %v240
      %v273 = vsub.f32 5.0, %v241
      %v274 = vsub.f32 5.0, %v242
      %v275 = vsub.f32 5.0, %v243
      %v276 = vadd.f32 %v212, 5.0
      %v277 = vadd.f32 %v213, 5.0
      %v278 = vadd.f32 %v214, 5.0
      %v279 = vadd.f32 %v215, 5.0
      %v280 = vadd.f32 %v216, 5.0
      %v281 = vadd.f32 %v217, 5.0
      %v282 = vadd.f32 %v218, 5.0
      %v283 = vadd.f32 %v219, 5.0
      %v284 = vadd.f32 %v220, 5.0
      %v285 = vadd.f32 %v221, 5.0
      %v286 = vadd.f32 %v222, 5.0
      %v287 = vadd.f32 %v223, 5.0
      %v288 = vadd.f32 %v224, 5.0
      %v289 = vadd.f32 %v225, 5.0
      %v290 = vadd.f32 %v226, 5.0
      %v291 = vadd.f32 %v227, 5.0
      %v292 = vadd.f32 %v228, 5.0
      %v293 = vadd.f32 %v229, 5.0
      %v294 = vadd.f32 %v230, 5.0
      %v295 = vadd.f32 %v231, 5.0
      %v296 = vadd.f32 %v232, 5.0
      %v297 = vadd.f32 %v233, 5.0
      %v298 = vadd.f32 %v234, 5.0
      %v299 = vadd.f32 %v235, 5.0
      %v300 = vadd.f32 %v236, 5.0
      %v301 = vadd.f32 %v237, 5.0
      %v302 = vadd.f32 %v238, 5.0
      %v303 = vadd.f32 %v239, 5.0
      %v304 = vadd.f32 %v240, 5.0
      %v305 = vadd.f32 %v241, 5.0
      %v306 = vadd.f32 %v242, 5.0
      %v307 = vadd.f32 %v243, 5.0
      %v308 = vmul.f32 %v244, %v276
      %v309 = vmul.f32 %v245, %v277
      %v310 = vmul.f32 %v246, %v278
      %v311 = vmul.f32 %v247, %v279
      %v312 = vmul.f32 %v248, %v280
      %v313 = vmul.f32 %v249, %v281
      %v314 = vmul.f32 %v250, %v282
      %v315 = vmul.f32 %v251, %v283
      %v316 = vmul.f32 %v252, %v284
      %v317 = vmul.f32 %v253, %v285
      %v318 = vmul.f32 %v254, %v286
      %v319 = vmul.f32 %v255, %v287
      %v320 = vmul.f32 %v256, %v288
      %v321 = vmul.f32 %v257, %v289
      %v322 = vmul.f32 %v258, %v290
      %v323 = vmul.f32 %v259, %v291
      %v324 = vmul.f32 %v260, %v292
      %v325 = vmul.f32 %v261, %v293
      %v326 = vmul.f32 %v262, %v294
      %v327 = vmul.f32 %v263, %v295
      %v328 = vmul.f32 %v264, %v296
      %v329 = vmul.f32 %v265, %v297
      %v330 = vmul.f32 %v266, %v298
      %v331 = vmul.f32 %v267, %v299
      %v332 = vmul.f32 %v268, %v300
      %v333 = vmul.f32 %v269, %v301
      %v334 = vmul.f32 %v270, %v302
      %v335 = vmul.f32 %v271, %v303
      %v336 = vmul.f32 %v272, %v304
      %v337 = vmul.f32 %v273, %v305
      %v338 = vmul.f32 %v274, %v306
      %v339 = vmul.f32 %v275, %v307
      %v340 = vmul.f32 %v212, %v212
      %v341 = vmul.f32 %v213, %v213
      %v342 = vmul.f32 %v214, %v214
      %v343 = vmul.f32 %v215, %v215
      %v344 = vmul.f32 %v216, %v216
      %v345 = vmul.f32 %v217, %v217
      %v346 = vmul.f32 %v218, %v218
      %v347 = vmul.f32 %v219, %v219
      %v348 = vmul.f32 %v220, %v220
      %v349 = vmul.f32 %v221, %v221
      %v350 = vmul.f32 %v222, %v222
      %v351 = vmul.f32 %v223, %v223
      %v352 = vmul.f32 %v224, %v224
      %v353 = vmul.f32 %v225, %v225
      %v354 = vmul.f32 %v226, %v226
      %v355 = vmul.f32 %v227, %v227
      %v356 = vmul.f32 %v228, %v228
      %v357 = vmul.f32 %v229, %v229
      %v358 = vmul.f32 %v230, %v230
      %v359 = vmul.f32 %v231, %v231
      %v360 = vmul.f32 %v232, %v232
      %v361 = vmul.f32 %v233, %v233
      %v362 = vmul.f32 %v234, %v234
      %v363 = vmul.f32 %v235, %v235
      %v364 = vmul.f32 %v236, %v236
      %v365 = vmul.f32 %v237, %v237
      %v366 = vmul.f32 %v238, %v238
      %v367 = vmul.f32 %v239, %v239
      %v368 = vmul.f32 %v240, %v240
      %v369 = vmul.f32 %v241, %v241
      %v370 = vmul.f32 %v242, %v242
      %v371 = vmul.f32 %v243, %v243
      %v372 = vrcp.pop %v308
      %v373 = vrcp.pop %v309
      %v374 = vrcp.pop %v310
      %v375 = vrcp.pop %v311
      %v376 = vrcp.pop %v312
      %v377 = vrcp.pop %v313
      %v378 = vrcp.pop %v314
      %v379 = vrcp.pop %v315
      %v380 = vrcp.pop %v316
      %v381 = vrcp.pop %v317
      %v382 = vrcp.pop %v318
      %v383 = vrcp.pop %v319
      %v384 = vrcp.pop %v320
      %v385 = vrcp.pop %v321
      %v386 = vrcp.pop %v322
      %v387 = vrcp.pop %v323
      %v388 = vrcp.pop %v324
      %v389 = vrcp.pop %v325
      %v390 = vrcp.pop %v326
      %v391 = vrcp.pop %v327
      %v392 = vrcp.pop %v328
      %v393 = vrcp.pop %v329
      %v394 = vrcp.pop %v330
      %v395 = vrcp.pop %v331
      %v396 = vrcp.pop %v332
      %v397 = vrcp.pop %v333
      %v398 = vrcp.pop %v334
      %v399 = vrcp.pop %v335
      %v400 = vrcp.pop %v336
      %v401 = vrcp.pop %v337
      %v402 = vrcp.pop %v338
      %v403 = vrcp.pop %v339
      %v404 = vmul.f32 %v340, %v372
      %v405 = vmul.f32 %v341, %v373
      %v406 = vmul.f32 %v342, %v374
      %v407 = vmul.f32 %v343, %v375
      %v408 = vmul.f32 %v344, %v376
      %v409 = vmul.f32 %v345, %v377
      %v410 = vmul.f32 %v346, %v378
      %v411 = vmul.f32 %v347, %v379
      %v412 = vmul.f32 %v348, %v380
      %v413 = vmul.f32 %v349, %v381
      %v414 = vmul.f32 %v350, %v382
      %v415 = vmul.f32 %v351, %v383
      %v416 = vmul.f32 %v352, %v384
      %v417 = vmul.f32 %v353, %v385
      %v418 = vmul.f32 %v354, %v386
      %v419 = vmul.f32 %v355, %v387
      %v420 = vmul.f32 %v356, %v388
      %v421 = vmul.f32 %v357, %v389
      %v422 = vmul.f32 %v358, %v390
      %v423 = vmul.f32 %v359, %v391
      %v424 = vmul.f32 %v360, %v392
      %v425 = vmul.f32 %v361, %v393
      %v426 = vmul.f32 %v362, %v394
      %v427 = vmul.f32 %v363, %v395
      %v428 = vmul.f32 %v364, %v396
      %v429 = vmul.f32 %v365, %v397
      %v430 = vmul.f32 %v366, %v398
      %v431 = vmul.f32 %v367, %v399
      %v432 = vmul.f32 %v368, %v400
      %v433 = vmul.f32 %v369, %v401
      %v434 = vmul.f32 %v370, %v402
      %v435 = vmul.f32 %v371, %v403
      %v436 = vmul.f32 %v147, %v147
      %v437 = vmul.f32 %v148, %v148
      %v438 = vmul.f32 %v149, %v149
      %v439 = vmul.f32 %v150, %v150
      %v440 = vmul.f32 %v151, %v151
      %v441 = vmul.f32 %v152, %v152
      %v442 = vmul.f32 %v153, %v153
      %v443 = vmul.f32 %v154, %v154
      %v444 = vmul.f32 %v155, %v155
      %v445 = vmul.f32 %v156, %v156
      %v446 = vmul.f32 %v157, %v157
      %v447 = vmul.f32 %v158, %v158
      %v448 = vmul.f32 %v159, %v159
      %v449 = vmul.f32 %v160, %v160
      %v450 = vmul.f32 %v161, %v161
      %v451 = vmul.f32 %v162, %v162
      %v452 = vmul.f32 %v163, %v163
      %v453 = vmul.f32 %v164, %v164
      %v454 = vmul.f32 %v165, %v165
      %v455 = vmul.f32 %v166, %v166
      %v456 = vmul.f32 %v167, %v167
      %v457 = vmul.f32 %v168, %v168
      %v458 = vmul.f32 %v169, %v169
      %v459 = vmul.f32 %v170, %v170
      %v460 = vmul.f32 %v171, %v171
      %v461 = vmul.f32 %v172, %v172
      %v462 = vmul.f32 %v173, %v173
      %v463 = vmul.f32 %v174, %v174
      %v464 = vmul.f32 %v175, %v175
      %v465 = vmul.f32 %v176, %v176
      %v466 = vmul.f32 %v177, %v177
      %v467 = vmul.f32 %v178, %v178
      %v468 = vmul.f32 %v436, 25.6
      %v469 = vmul.f32 %v437, 25.6
      %v470 = vmul.f32 %v438, 25.6
      %v471 = vmul.f32 %v439, 25.6
      %v472 = vmul.f32 %v440, 25.6
      %v473 = vmul.f32 %v441, 25.6
      %v474 = vmul.f32 %v442, 25.6
      %v475 = vmul.f32 %v443, 25.6
      %v476 = vmul.f32 %v444, 25.6
      %v477 = vmul.f32 %v445, 25.6
      %v478 = vmul.f32 %v446, 25.6
      %v479 = vmul.f32 %v447, 25.6
      %v480 = vmul.f32 %v448, 25.6
      %v481 = vmul.f32 %v449, 25.6
      %v482 = vmul.f32 %v450, 25.6
      %v483 = vmul.f32 %v451, 25.6
      %v484 = vmul.f32 %v452, 25.6
      %v485 = vmul.f32 %v453, 25.6
      %v486 = vmul.f32 %v454, 25.6
      %v487 = vmul.f32 %v455, 25.6
      %v488 = vmul.f32 %v456, 25.6
      %v489 = vmul.f32 %v457, 25.6
      %v490 = vmul.f32 %v458, 25.6
      %v491 = vmul.f32 %v459, 25.6
      %v492 = vmul.f32 %v460, 25.6
      %v493 = vmul.f32 %v461, 25.6
      %v494 = vmul.f32 %v462, 25.6
      %v495 = vmul.f32 %v463, 25.6
      %v496 = vmul.f32 %v464, 25.6
      %v497 = vmul.f32 %v465, 25.6
      %v498 = vmul.f32 %v466, 25.6
      %v499 = vmul.f32 %v467, 25.6
      %v500 = vadd.f32 %v404, %v468
      %v501 = vadd.f32 %v405, %v469
      %v502 = vadd.f32 %v406, %v470
      %v503 = vadd.f32 %v407, %v471
      %v504 = vadd.f32 %v408, %v472
      %v505 = vadd.f32 %v409, %v473
      %v506 = vadd.f32 %v410, %v474
      %v507 = vadd.f32 %v411, %v475
      %v508 = vadd.f32 %v412, %v476
      %v509 = vadd.f32 %v413, %v477
      %v510 = vadd.f32 %v414, %v478
      %v511 = vadd.f32 %v415, %v479
      %v512 = vadd.f32 %v416, %v480
      %v513 = vadd.f32 %v417, %v481
      %v514 = vadd.f32 %v418, %v482
      %v515 = vadd.f32 %v419, %v483
      %v516 = vadd.f32 %v420, %v484
      %v517 = vadd.f32 %v421, %v485
      %v518 = vadd.f32 %v422, %v486
      %v519 = vadd.f32 %v423, %v487
      %v520 = vadd.f32 %v424, %v488
      %v521 = vadd.f32 %v425, %v489
      %v522 = vadd.f32 %v426, %v490
      %v523 = vadd.f32 %v427, %v491
      %v524 = vadd.f32 %v428, %v492
      %v525 = vadd.f32 %v429, %v493
      %v526 = vadd.f32 %v430, %v494
      %v527 = vadd.f32 %v431, %v495
      %v528 = vadd.f32 %v432, %v496
      %v529 = vadd.f32 %v433, %v497
      %v530 = vadd.f32 %v434, %v498
      %v531 = vadd.f32 %v435, %v499
      %v532 = vsub.f32 0.0, %v500
      %v533 = vsub.f32 0.0, %v501
      %v534 = vsub.f32 0.0, %v502
      %v535 = vsub.f32 0.0, %v503
      %v536 = vsub.f32 0.0, %v504
      %v537 = vsub.f32 0.0, %v505
      %v538 = vsub.f32 0.0, %v506
      %v539 = vsub.f32 0.0, %v507
      %v540 = vsub.f32 0.0, %v508
      %v541 = vsub.f32 0.0, %v509
      %v542 = vsub.f32 0.0, %v510
      %v543 = vsub.f32 0.0, %v511
      %v544 = vsub.f32 0.0, %v512
      %v545 = vsub.f32 0.0, %v513
      %v546 = vsub.f32 0.0, %v514
      %v547 = vsub.f32 0.0, %v515
      %v548 = vsub.f32 0.0, %v516
      %v549 = vsub.f32 0.0, %v517
      %v550 = vsub.f32 0.0, %v518
      %v551 = vsub.f32 0.0, %v519
      %v552 = vsub.f32 0.0, %v520
      %v553 = vsub.f32 0.0, %v521
      %v554 = vsub.f32 0.0, %v522
      %v555 = vsub.f32 0.0, %v523
      %v556 = vsub.f32 0.0, %v524
      %v557 = vsub.f32 0.0, %v525
      %v558 = vsub.f32 0.0, %v526
      %v559 = vsub.f32 0.0, %v527
      %v560 = vsub.f32 0.0, %v528
      %v561 = vsub.f32 0.0, %v529
      %v562 = vsub.f32 0.0, %v530
      %v563 = vsub.f32 0.0, %v531
      %v564 = vsel %vm180, %v532, -inf
      %v565 = vsel %vm181, %v533, -inf
      %v566 = vsel %vm182, %v534, -inf
      %v567 = vsel %vm183, %v535, -inf
      %v568 = vsel %vm184, %v536, -inf
      %v569 = vsel %vm185, %v537, -inf
      %v570 = vsel %vm186, %v538, -inf
      %v571 = vsel %vm187, %v539, -inf
      %v572 = vsel %vm188, %v540, -inf
      %v573 = vsel %vm189, %v541, -inf
      %v574 = vsel %vm190, %v542, -inf
      %v575 = vsel %vm191, %v543, -inf
      %v576 = vsel %vm192, %v544, -inf
      %v577 = vsel %vm193, %v545, -inf
      %v578 = vsel %vm194, %v546, -inf
      %v579 = vsel %vm195, %v547, -inf
      %v580 = vsel %vm196, %v548, -inf
      %v581 = vsel %vm197, %v549, -inf
      %v582 = vsel %vm198, %v550, -inf
      %v583 = vsel %vm199, %v551, -inf
      %v584 = vsel %vm200, %v552, -inf
      %v585 = vsel %vm201, %v553, -inf
      %v586 = vsel %vm202, %v554, -inf
      %v587 = vsel %vm203, %v555, -inf
      %v588 = vsel %vm204, %v556, -inf
      %v589 = vsel %vm205, %v557, -inf
      %v590 = vsel %vm206, %v558, -inf
      %v591 = vsel %vm207, %v559, -inf
      %v592 = vsel %vm208, %v560, -inf
      %v593 = vsel %vm209, %v561, -inf
      %v594 = vsel %vm210, %v562, -inf
      %v595 = vsel %vm211, %v563, -inf
      %v596 = vmul.f32 %v147, 51.2
      %v597 = vmul.f32 %v148, 51.2
      %v598 = vmul.f32 %v149, 51.2
      %v599 = vmul.f32 %v150, 51.2
      %v600 = vmul.f32 %v151, 51.2
      %v601 = vmul.f32 %v152, 51.2
      %v602 = vmul.f32 %v153, 51.2
      %v603 = vmul.f32 %v154, 51.2
      %v604 = vmul.f32 %v155, 51.2
      %v605 = vmul.f32 %v156, 51.2
      %v606 = vmul.f32 %v157, 51.2
      %v607 = vmul.f32 %v158, 51.2
      %v608 = vmul.f32 %v159, 51.2
      %v609 = vmul.f32 %v160, 51.2
      %v610 = vmul.f32 %v161, 51.2
      %v611 = vmul.f32 %v162, 51.2
      %v612 = vmul.f32 %v163, 51.2
      %v613 = vmul.f32 %v164, 51.2
      %v614 = vmul.f32 %v165, 51.2
      %v615 = vmul.f32 %v166, 51.2
      %v616 = vmul.f32 %v167, 51.2
      %v617 = vmul.f32 %v168, 51.2
      %v618 = vmul.f32 %v169, 51.2
      %v619 = vmul.f32 %v170, 51.2
      %v620 = vmul.f32 %v171, 51.2
      %v621 = vmul.f32 %v172, 51.2
      %v622 = vmul.f32 %v173, 51.2
      %v623 = vmul.f32 %v174, 51.2
      %v624 = vmul.f32 %v175, 51.2
      %v625 = vmul.f32 %v176, 51.2
      %v626 = vmul.f32 %v177, 51.2
      %v627 = vmul.f32 %v178, 51.2
      %629 = vset.pattern.permute.xlu0 0
      %630 = vperm.xlu0 %629, %v596
      %v631 = vpop.permute.xlu0 %630
      %634 = vset.pattern.permute.xlu0 0
      %635 = vperm.xlu0 %634, %v597
      %v636 = vpop.permute.xlu0 %635
      %639 = vset.pattern.permute.xlu0 0
      %640 = vperm.xlu0 %639, %v598
      %v641 = vpop.permute.xlu0 %640
      %644 = vset.pattern.permute.xlu0 0
      %645 = vperm.xlu0 %644, %v599
      %v646 = vpop.permute.xlu0 %645
      %649 = vset.pattern.permute.xlu0 0
      %650 = vperm.xlu0 %649, %v600
      %v651 = vpop.permute.xlu0 %650
      %654 = vset.pattern.permute.xlu0 0
      %655 = vperm.xlu0 %654, %v601
      %v656 = vpop.permute.xlu0 %655
      %659 = vset.pattern.permute.xlu0 0
      %660 = vperm.xlu0 %659, %v602
      %v661 = vpop.permute.xlu0 %660
      %664 = vset.pattern.permute.xlu0 0
      %665 = vperm.xlu0 %664, %v603
      %v666 = vpop.permute.xlu0 %665
      %669 = vset.pattern.permute.xlu0 0
      %670 = vperm.xlu0 %669, %v604
      %v671 = vpop.permute.xlu0 %670
      %674 = vset.pattern.permute.xlu0 0
      %675 = vperm.xlu0 %674, %v605
      %v676 = vpop.permute.xlu0 %675
      %679 = vset.pattern.permute.xlu0 0
      %680 = vperm.xlu0 %679, %v606
      %v681 = vpop.permute.xlu0 %680
      %684 = vset.pattern.permute.xlu0 0
      %685 = vperm.xlu0 %684, %v607
      %v686 = vpop.permute.xlu0 %685
      %689 = vset.pattern.permute.xlu0 0
      %690 = vperm.xlu0 %689, %v608
      %v691 = vpop.permute.xlu0 %690
      %694 = vset.pattern.permute.xlu0 0
      %695 = vperm.xlu0 %694, %v609
      %v696 = vpop.permute.xlu0 %695
      %699 = vset.pattern.permute.xlu0 0
      %700 = vperm.xlu0 %699, %v610
      %v701 = vpop.permute.xlu0 %700
      %704 = vset.pattern.permute.xlu0 0
      %705 = vperm.xlu0 %704, %v611
      %v706 = vpop.permute.xlu0 %705
      %709 = vset.pattern.permute.xlu0 0
      %710 = vperm.xlu0 %709, %v612
      %v711 = vpop.permute.xlu0 %710
      %714 = vset.pattern.permute.xlu0 0
      %715 = vperm.xlu0 %714, %v613
      %v716 = vpop.permute.xlu0 %715
      %719 = vset.pattern.permute.xlu0 0
      %720 = vperm.xlu0 %719, %v614
      %v721 = vpop.permute.xlu0 %720
      %724 = vset.pattern.permute.xlu0 0
      %725 = vperm.xlu0 %724, %v615
      %v726 = vpop.permute.xlu0 %725
      %729 = vset.pattern.permute.xlu0 0
      %730 = vperm.xlu0 %729, %v616
      %v731 = vpop.permute.xlu0 %730
      %734 = vset.pattern.permute.xlu0 0
      %735 = vperm.xlu0 %734, %v617
      %v736 = vpop.permute.xlu0 %735
      %739 = vset.pattern.permute.xlu0 0
      %740 = vperm.xlu0 %739, %v618
      %v741 = vpop.permute.xlu0 %740
      %744 = vset.pattern.permute.xlu0 0
      %745 = vperm.xlu0 %744, %v619
      %v746 = vpop.permute.xlu0 %745
      %749 = vset.pattern.permute.xlu0 0
      %750 = vperm.xlu0 %749, %v620
      %v751 = vpop.permute.xlu0 %750
      %754 = vset.pattern.permute.xlu0 0
      %755 = vperm.xlu0 %754, %v621
      %v756 = vpop.permute.xlu0 %755
      %759 = vset.pattern.permute.xlu0 0
      %760 = vperm.xlu0 %759, %v622
      %v761 = vpop.permute.xlu0 %760
      %764 = vset.pattern.permute.xlu0 0
      %765 = vperm.xlu0 %764, %v623
      %v766 = vpop.permute.xlu0 %765
      %769 = vset.pattern.permute.xlu0 0
      %770 = vperm.xlu0 %769, %v624
      %v771 = vpop.permute.xlu0 %770
      %774 = vset.pattern.permute.xlu0 0
      %775 = vperm.xlu0 %774, %v625
      %v776 = vpop.permute.xlu0 %775
      %779 = vset.pattern.permute.xlu0 0
      %780 = vperm.xlu0 %779, %v626
      %v781 = vpop.permute.xlu0 %780
      %784 = vset.pattern.permute.xlu0 0
      %785 = vperm.xlu0 %784, %v627
      %v786 = vpop.permute.xlu0 %785
      %v788 = vperm.slane %v179, 0
      %v789 = vmul.f32 %v631, %v788
      %v790 = vmul.f32 %v636, %v788
      %v791 = vmul.f32 %v641, %v788
      %v792 = vmul.f32 %v646, %v788
      %v793 = vmul.f32 %v651, %v788
      %v794 = vmul.f32 %v656, %v788
      %v795 = vmul.f32 %v661, %v788
      %v796 = vmul.f32 %v666, %v788
      %v797 = vmul.f32 %v671, %v788
      %v798 = vmul.f32 %v676, %v788
      %v799 = vmul.f32 %v681, %v788
      %v800 = vmul.f32 %v686, %v788
      %v801 = vmul.f32 %v691, %v788
      %v802 = vmul.f32 %v696, %v788
      %v803 = vmul.f32 %v701, %v788
      %v804 = vmul.f32 %v706, %v788
      %v805 = vmul.f32 %v711, %v788
      %v806 = vmul.f32 %v716, %v788
      %v807 = vmul.f32 %v721, %v788
      %v808 = vmul.f32 %v726, %v788
      %v809 = vmul.f32 %v731, %v788
      %v810 = vmul.f32 %v736, %v788
      %v811 = vmul.f32 %v741, %v788
      %v812 = vmul.f32 %v746, %v788
      %v813 = vmul.f32 %v751, %v788
      %v814 = vmul.f32 %v756, %v788
      %v815 = vmul.f32 %v761, %v788
      %v816 = vmul.f32 %v766, %v788
      %v817 = vmul.f32 %v771, %v788
      %v818 = vmul.f32 %v776, %v788
      %v819 = vmul.f32 %v781, %v788
      %v820 = vmul.f32 %v786, %v788
      %v821 = vperm.slane %v179, 1
      %v822 = vadd.f32 %v789, %v821
      %v823 = vadd.f32 %v790, %v821
      %v824 = vadd.f32 %v791, %v821
      %v825 = vadd.f32 %v792, %v821
      %v826 = vadd.f32 %v793, %v821
      %v827 = vadd.f32 %v794, %v821
      %v828 = vadd.f32 %v795, %v821
      %v829 = vadd.f32 %v796, %v821
      %v830 = vadd.f32 %v797, %v821
      %v831 = vadd.f32 %v798, %v821
      %v832 = vadd.f32 %v799, %v821
      %v833 = vadd.f32 %v800, %v821
      %v834 = vadd.f32 %v801, %v821
      %v835 = vadd.f32 %v802, %v821
      %v836 = vadd.f32 %v803, %v821
      %v837 = vadd.f32 %v804, %v821
      %v838 = vadd.f32 %v805, %v821
      %v839 = vadd.f32 %v806, %v821
      %v840 = vadd.f32 %v807, %v821
      %v841 = vadd.f32 %v808, %v821
      %v842 = vadd.f32 %v809, %v821
      %v843 = vadd.f32 %v810, %v821
      %v844 = vadd.f32 %v811, %v821
      %v845 = vadd.f32 %v812, %v821
      %v846 = vadd.f32 %v813, %v821
      %v847 = vadd.f32 %v814, %v821
      %v848 = vadd.f32 %v815, %v821
      %v849 = vadd.f32 %v816, %v821
      %v850 = vadd.f32 %v817, %v821
      %v851 = vadd.f32 %v818, %v821
      %v852 = vadd.f32 %v819, %v821
      %v853 = vadd.f32 %v820, %v821
      %855 = vset.pattern.permute.xlu0 0
      %856 = vperm.xlu0 %855, %v564
      %v857 = vpop.permute.xlu0 %856
      %860 = vset.pattern.permute.xlu0 0
      %861 = vperm.xlu0 %860, %v565
      %v862 = vpop.permute.xlu0 %861
      %865 = vset.pattern.permute.xlu0 0
      %866 = vperm.xlu0 %865, %v566
      %v867 = vpop.permute.xlu0 %866
      %870 = vset.pattern.permute.xlu0 0
      %871 = vperm.xlu0 %870, %v567
      %v872 = vpop.permute.xlu0 %871
      %875 = vset.pattern.permute.xlu0 0
      %876 = vperm.xlu0 %875, %v568
      %v877 = vpop.permute.xlu0 %876
      %880 = vset.pattern.permute.xlu0 0
      %881 = vperm.xlu0 %880, %v569
      %v882 = vpop.permute.xlu0 %881
      %885 = vset.pattern.permute.xlu0 0
      %886 = vperm.xlu0 %885, %v570
      %v887 = vpop.permute.xlu0 %886
      %890 = vset.pattern.permute.xlu0 0
      %891 = vperm.xlu0 %890, %v571
      %v892 = vpop.permute.xlu0 %891
      %895 = vset.pattern.permute.xlu0 0
      %896 = vperm.xlu0 %895, %v572
      %v897 = vpop.permute.xlu0 %896
      %900 = vset.pattern.permute.xlu0 0
      %901 = vperm.xlu0 %900, %v573
      %v902 = vpop.permute.xlu0 %901
      %905 = vset.pattern.permute.xlu0 0
      %906 = vperm.xlu0 %905, %v574
      %v907 = vpop.permute.xlu0 %906
      %910 = vset.pattern.permute.xlu0 0
      %911 = vperm.xlu0 %910, %v575
      %v912 = vpop.permute.xlu0 %911
      %915 = vset.pattern.permute.xlu0 0
      %916 = vperm.xlu0 %915, %v576
      %v917 = vpop.permute.xlu0 %916
      %920 = vset.pattern.permute.xlu0 0
      %921 = vperm.xlu0 %920, %v577
      %v922 = vpop.permute.xlu0 %921
      %925 = vset.pattern.permute.xlu0 0
      %926 = vperm.xlu0 %925, %v578
      %v927 = vpop.permute.xlu0 %926
      %930 = vset.pattern.permute.xlu0 0
      %931 = vperm.xlu0 %930, %v579
      %v932 = vpop.permute.xlu0 %931
      %935 = vset.pattern.permute.xlu0 0
      %936 = vperm.xlu0 %935, %v580
      %v937 = vpop.permute.xlu0 %936
      %940 = vset.pattern.permute.xlu0 0
      %941 = vperm.xlu0 %940, %v581
      %v942 = vpop.permute.xlu0 %941
      %945 = vset.pattern.permute.xlu0 0
      %946 = vperm.xlu0 %945, %v582
      %v947 = vpop.permute.xlu0 %946
      %950 = vset.pattern.permute.xlu0 0
      %951 = vperm.xlu0 %950, %v583
      %v952 = vpop.permute.xlu0 %951
      %955 = vset.pattern.permute.xlu0 0
      %956 = vperm.xlu0 %955, %v584
      %v957 = vpop.permute.xlu0 %956
      %960 = vset.pattern.permute.xlu0 0
      %961 = vperm.xlu0 %960, %v585
      %v962 = vpop.permute.xlu0 %961
      %965 = vset.pattern.permute.xlu0 0
      %966 = vperm.xlu0 %965, %v586
      %v967 = vpop.permute.xlu0 %966
      %970 = vset.pattern.permute.xlu0 0
      %971 = vperm.xlu0 %970, %v587
      %v972 = vpop.permute.xlu0 %971
      %975 = vset.pattern.permute.xlu0 0
      %976 = vperm.xlu0 %975, %v588
      %v977 = vpop.permute.xlu0 %976
      %980 = vset.pattern.permute.xlu0 0
      %981 = vperm.xlu0 %980, %v589
      %v982 = vpop.permute.xlu0 %981
      %985 = vset.pattern.permute.xlu0 0
      %986 = vperm.xlu0 %985, %v590
      %v987 = vpop.permute.xlu0 %986
      %990 = vset.pattern.permute.xlu0 0
      %991 = vperm.xlu0 %990, %v591
      %v992 = vpop.permute.xlu0 %991
      %995 = vset.pattern.permute.xlu0 0
      %996 = vperm.xlu0 %995, %v592
      %v997 = vpop.permute.xlu0 %996
      %1000 = vset.pattern.permute.xlu0 0
      %1001 = vperm.xlu0 %1000, %v593
      %v1002 = vpop.permute.xlu0 %1001
      %1005 = vset.pattern.permute.xlu0 0
      %1006 = vperm.xlu0 %1005, %v594
      %v1007 = vpop.permute.xlu0 %1006
      %1010 = vset.pattern.permute.xlu0 0
      %1011 = vperm.xlu0 %1010, %v595
      %v1012 = vpop.permute.xlu0 %1011
      %v1014 = vadd.f32 %v822, %v857
      %v1015 = vadd.f32 %v823, %v862
      %v1016 = vadd.f32 %v824, %v867
      %v1017 = vadd.f32 %v825, %v872
      %v1018 = vadd.f32 %v826, %v877
      %v1019 = vadd.f32 %v827, %v882
      %v1020 = vadd.f32 %v828, %v887
      %v1021 = vadd.f32 %v829, %v892
      %v1022 = vadd.f32 %v830, %v897
      %v1023 = vadd.f32 %v831, %v902
      %v1024 = vadd.f32 %v832, %v907
      %v1025 = vadd.f32 %v833, %v912
      %v1026 = vadd.f32 %v834, %v917
      %v1027 = vadd.f32 %v835, %v922
      %v1028 = vadd.f32 %v836, %v927
      %v1029 = vadd.f32 %v837, %v932
      %v1030 = vadd.f32 %v838, %v937
      %v1031 = vadd.f32 %v839, %v942
      %v1032 = vadd.f32 %v840, %v947
      %v1033 = vadd.f32 %v841, %v952
      %v1034 = vadd.f32 %v842, %v957
      %v1035 = vadd.f32 %v843, %v962
      %v1036 = vadd.f32 %v844, %v967
      %v1037 = vadd.f32 %v845, %v972
      %v1038 = vadd.f32 %v846, %v977
      %v1039 = vadd.f32 %v847, %v982
      %v1040 = vadd.f32 %v848, %v987
      %v1041 = vadd.f32 %v849, %v992
      %v1042 = vadd.f32 %v850, %v997
      %v1043 = vadd.f32 %v851, %v1002
      %v1044 = vadd.f32 %v852, %v1007
      %v1045 = vadd.f32 %v853, %v1012
      %v1046 = vmul.f32 %v1014, 1.442695
      %v1047 = vpow.pop %v1046
      %v1048 = vmul.f32 %v1015, 1.442695
      %v1049 = vpow.pop %v1048
      %v1050 = vmul.f32 %v1016, 1.442695
      %v1051 = vpow.pop %v1050
      %v1052 = vmul.f32 %v1017, 1.442695
      %v1053 = vpow.pop %v1052
      %v1054 = vmul.f32 %v1018, 1.442695
      %v1055 = vpow.pop %v1054
      %v1056 = vmul.f32 %v1019, 1.442695
      %v1057 = vpow.pop %v1056
      %v1058 = vmul.f32 %v1020, 1.442695
      %v1059 = vpow.pop %v1058
      %v1060 = vmul.f32 %v1021, 1.442695
      %v1061 = vpow.pop %v1060
      %v1062 = vmul.f32 %v1022, 1.442695
      %v1063 = vpow.pop %v1062
      %v1064 = vmul.f32 %v1023, 1.442695
      %v1065 = vpow.pop %v1064
      %v1066 = vmul.f32 %v1024, 1.442695
      %v1067 = vpow.pop %v1066
      %v1068 = vmul.f32 %v1025, 1.442695
      %v1069 = vpow.pop %v1068
      %v1070 = vmul.f32 %v1026, 1.442695
      %v1071 = vpow.pop %v1070
      %v1072 = vmul.f32 %v1027, 1.442695
      %v1073 = vpow.pop %v1072
      %v1074 = vmul.f32 %v1028, 1.442695
      %v1075 = vpow.pop %v1074
      %v1076 = vmul.f32 %v1029, 1.442695
      %v1077 = vpow.pop %v1076
      %v1078 = vmul.f32 %v1030, 1.442695
      %v1079 = vpow.pop %v1078
      %v1080 = vmul.f32 %v1031, 1.442695
      %v1081 = vpow.pop %v1080
      %v1082 = vmul.f32 %v1032, 1.442695
      %v1083 = vpow.pop %v1082
      %v1084 = vmul.f32 %v1033, 1.442695
      %v1085 = vpow.pop %v1084
      %v1086 = vmul.f32 %v1034, 1.442695
      %v1087 = vpow.pop %v1086
      %v1088 = vmul.f32 %v1035, 1.442695
      %v1089 = vpow.pop %v1088
      %v1090 = vmul.f32 %v1036, 1.442695
      %v1091 = vpow.pop %v1090
      %v1092 = vmul.f32 %v1037, 1.442695
      %v1093 = vpow.pop %v1092
      %v1094 = vmul.f32 %v1038, 1.442695
      %v1095 = vpow.pop %v1094
      %v1096 = vmul.f32 %v1039, 1.442695
      %v1097 = vpow.pop %v1096
      %v1098 = vmul.f32 %v1040, 1.442695
      %v1099 = vpow.pop %v1098
      %v1100 = vmul.f32 %v1041, 1.442695
      %v1101 = vpow.pop %v1100
      %v1102 = vmul.f32 %v1042, 1.442695
      %v1103 = vpow.pop %v1102
      %v1104 = vmul.f32 %v1043, 1.442695
      %v1105 = vpow.pop %v1104
      %v1106 = vmul.f32 %v1044, 1.442695
      %v1107 = vpow.pop %v1106
      %v1108 = vmul.f32 %v1045, 1.442695
      %v1109 = vpow.pop %v1108
      %1110 = vst [vmem:[%s145] sm:$0xff] %v1047
      %1111 = vst [vmem:[%s145 + $0x8] sm:$0xff] %v1049
      %1112 = vst [vmem:[%s145 + $0x10] sm:$0xff] %v1051
      %1113 = vst [vmem:[%s145 + $0x18] sm:$0xff] %v1053
      %1114 = vst [vmem:[%s145 + $0x20] sm:$0xff] %v1055
      %1115 = vst [vmem:[%s145 + $0x28] sm:$0xff] %v1057
      %1116 = vst [vmem:[%s145 + $0x30] sm:$0xff] %v1059
      %1117 = vst [vmem:[%s145 + $0x38] sm:$0xff] %v1061
      %1118 = vst [vmem:[%s145 + $0x40] sm:$0xff] %v1063
      %1119 = vst [vmem:[%s145 + $0x48] sm:$0xff] %v1065
      %1120 = vst [vmem:[%s145 + $0x50] sm:$0xff] %v1067
      %1121 = vst [vmem:[%s145 + $0x58] sm:$0xff] %v1069
      %1122 = vst [vmem:[%s145 + $0x60] sm:$0xff] %v1071
      %1123 = vst [vmem:[%s145 + $0x68] sm:$0xff] %v1073
      %1124 = vst [vmem:[%s145 + $0x70] sm:$0xff] %v1075
      %1125 = vst [vmem:[%s145 + $0x78] sm:$0xff] %v1077
      %1126 = vst [vmem:[%s145 + $0x80] sm:$0xff] %v1079
      %1127 = vst [vmem:[%s145 + $0x88] sm:$0xff] %v1081
      %1128 = vst [vmem:[%s145 + $0x90] sm:$0xff] %v1083
      %1129 = vst [vmem:[%s145 + $0x98] sm:$0xff] %v1085
      %1130 = vst [vmem:[%s145 + $0xa0] sm:$0xff] %v1087
      %1131 = vst [vmem:[%s145 + $0xa8] sm:$0xff] %v1089
      %1132 = vst [vmem:[%s145 + $0xb0] sm:$0xff] %v1091
      %1133 = vst [vmem:[%s145 + $0xb8] sm:$0xff] %v1093
      %1134 = vst [vmem:[%s145 + $0xc0] sm:$0xff] %v1095
      %1135 = vst [vmem:[%s145 + $0xc8] sm:$0xff] %v1097
      %1136 = vst [vmem:[%s145 + $0xd0] sm:$0xff] %v1099
      %1137 = vst [vmem:[%s145 + $0xd8] sm:$0xff] %v1101
      %1138 = vst [vmem:[%s145 + $0xe0] sm:$0xff] %v1103
      %1139 = vst [vmem:[%s145 + $0xe8] sm:$0xff] %v1105
      %1140 = vst [vmem:[%s145 + $0xf0] sm:$0xff] %v1107
      %1141 = vst [vmem:[%s145 + $0xf8] sm:$0xff] %v1109
      %s1142 = smul.u32 32, %s13
      %p1143 = scmp.lt.s32.totalorder %s1142, 127
      %s1144 = scalar_select %p1143, %s1142, 127
      %s1145 = smul.addr %s1144, 8
      %s1146 = scalar_lea.vmem %s2, %s1145
      // Predicated region
      $region29: #{gaussian_rbf.1} parent=27 // pred_check
        %p1147 = pneg %p78
      $region30: #{gaussian_rbf.1} parent=27 // pred_check_branch
        %1149 = sbr.rel (%p1147) target = $region32
      $region31: #{gaussian_rbf.1} parent=27 // pred_region
        %s1150 = smul.u32 32, %s13
      $region32: #{gaussian_rbf.1} parent=27 // pred_fallthru
        _
    $region28: #{gaussian_rbf.1} parent=5 // pred_fallthru
      _
    %p1151 = scmp.le.s32.totalorder 2, %s8
    // Predicated region
    $region33: #{gaussian_rbf.1} parent=5 // pred_check
      %p1152 = pneg %p1151
    $region34: #{gaussian_rbf.1} parent=5 // pred_check_branch
      %1154 = sbr.rel (%p1152) target = $region36
    $region35: #{gaussian_rbf.1} parent=5 // pred_region
      %s1155 = ssub.s32 %s8, 2
      // Predicated region
      $region37: #{gaussian_rbf.1} parent=35 // pred_check
        %p1156 = pneg %p84
      $region38: #{gaussian_rbf.1} parent=35 // pred_check_branch
        %1158 = sbr.rel (%p1156) target = $region40
      $region39: #{gaussian_rbf.1} parent=35 // pred_region
        %s1159 = smul.u32 32, %s14
        %p1160 = scmp.lt.s32.totalorder %s1159, 127
        %s1161 = scalar_select %p1160, %s1159, 127
        %s1162 = smul.addr %s1161, 8
        %s1163 = scalar_lea.vmem %s2, %s1162
      $region40: #{gaussian_rbf.1} parent=35 // pred_fallthru
        _
    $region36: #{gaussian_rbf.1} parent=5 // pred_fallthru
      _
  $region6: #{gaussian_rbf.1} parent=0 // loop_footer
    %s12 = sadd.s32 1, %s8
  $region7: #{gaussian_rbf.1} parent=0 // loop_footer_branch
    %7 = sbr.rel target = $region3
  $region8: #{gaussian_rbf.1} parent=0 // loop_exit
    _

</llo_original>
